<compile_context>
chip_gen: v5e
topology: v5e:2x2
jax: 0.10.0
libtpu: 0.0.40
codegen_flags: <defaults>
</compile_context>

<pallas_src>
import jax
import jax.numpy as jnp
from jax import lax
from jax.experimental import pallas as pl
from jax.experimental.pallas import tpu as pltpu

D_IN = 28 * 28      # 784 input features per row (no lane padding of the input)
NCLS = 10           # number of classes (conv2 output channels)
C_OUT = 16          # output lanes: 10 valid classes + 6 zero-weight pad lanes (64 B rows)
MAX_TB = 1024       # batch tile: 2 bufs * 1024 * 784 * 4B ~ 6.4 MiB input DMA buffers


def _kernel(x_ref, w_ref, out_ref):
    """x_ref:   (TB, D_IN)  f32 input rows (ragged last tile may hold garbage rows)
       w_ref:   (D_IN, C_OUT) f32 folded conv1*conv2 weight, columns >= NCLS are zero
       out_ref: (TB, C_OUT) f32 log-softmax (classes in lanes 0..9)
    """
    x = x_ref[...]
    w = w_ref[...]

    # Manual 3xBF16 (== lax.Precision.HIGH) matmul: hi/lo split, native bf16 MXU dots,
    # f32 accumulation.  Cheaper than the 6-pass HIGHEST f32 emulation, accurate to
    # ~1e-6 for these magnitudes.
    x_hi = x.astype(jnp.bfloat16)
    x_lo = (x - x_hi.astype(jnp.float32)).astype(jnp.bfloat16)
    w_hi = w.astype(jnp.bfloat16)
    w_lo = (w - w_hi.astype(jnp.float32)).astype(jnp.bfloat16)

    logits = (
        jnp.dot(x_hi, w_hi, preferred_element_type=jnp.float32)
        + jnp.dot(x_lo, w_hi, preferred_element_type=jnp.float32)
        + jnp.dot(x_hi, w_lo, preferred_element_type=jnp.float32)
    )                                                           # (TB, C_OUT) f32

    # Log-softmax over the NCLS valid lanes; the 6 zero-weight pad lanes are excluded.
    lane = lax.broadcasted_iota(jnp.int32, logits.shape, 1)
    valid = lane < NCLS
    m = jnp.max(jnp.where(valid, logits, -jnp.inf), axis=-1, keepdims=True)
    z = logits - m
    e = jnp.where(valid, jnp.exp(z), 0.0)
    lse = jnp.log(jnp.sum(e, axis=-1, keepdims=True))
    out_ref[...] = (z - lse).astype(out_ref.dtype)


def _fold_weights(w1, w2):
    """Fold the linear conv1 -> conv2 chain into one (D_IN, C_OUT) matmul operand.

    w1: (27, 1, 27, 27) OIHW, w2: (10, 27, 2, 2) OIHW.
    logits[b,f] = sum_{p,q,u,v,c} x2d[b,p+u,q+v] * w1[c,0,u,v] * w2[f,c,p,q]
    """
    w1c = w1.astype(jnp.float32)[:, 0]                          # (27, 27, 27)
    w2f = w2.astype(jnp.float32)                                # (10, 27, 2, 2)
    w_eff = jnp.zeros((NCLS, 28, 28), jnp.float32)
    for p in range(2):
        for q in range(2):
            contrib = jnp.einsum("cuv,fc->fuv", w1c, w2f[:, :, p, q],
                                 precision=lax.Precision.HIGHEST)   # (10, 27, 27)
            w_eff = w_eff.at[:, p:p + 27, q:q + 27].add(contrib)
    w_mat = w_eff.reshape(NCLS, D_IN).T                         # (784, 10)
    return jnp.pad(w_mat, ((0, 0), (0, C_OUT - NCLS)))          # (784, 16), zero pad cols


def _choose_tb(B):
    """Batch tile: sublane-aligned, <= MAX_TB, and >=2 grid steps when possible so the
    'parallel' batch axis can be split across both v7x TensorCores."""
    if B <= 8:
        return B                      # block dim == full array dim -> legal
    n_steps = max(2, -(-B // MAX_TB))
    tb = -(-B // n_steps)             # ceil(B / n_steps)
    tb = ((tb + 7) // 8) * 8          # 8-row (sublane) aligned
    return min(tb, MAX_TB)


@jax.jit
def conv2dsigmoid_5_forward(x, w1, w2):
    B = x.shape[0]
    x = x.astype(jnp.float32).reshape(B, D_IN)                  # no padding copy
    w_eff = _fold_weights(w1, w2)                               # (784, 16)

    TB = _choose_tb(B)
    grid = (pl.cdiv(B, TB),)                                    # ragged last tile OK

    out = pl.pallas_call(
        _kernel,
        out_shape=jax.ShapeDtypeStruct((B, C_OUT), jnp.float32),
        grid=grid,
        in_specs=[
            pl.BlockSpec((TB, D_IN), lambda i: (i, 0)),         # streamed input tiles
            pl.BlockSpec((D_IN, C_OUT), lambda i: (0, 0)),      # weight stays resident
        ],
        out_specs=pl.BlockSpec((TB, C_OUT), lambda i: (i, 0)),
        compiler_params=pltpu.CompilerParams(
            dimension_semantics=("parallel",),
            vmem_limit_bytes=32 * 1024 * 1024,                  # safe on v5e/v6e/v7x
        ),
    )(x, w_eff)
    return out[:, :NCLS]                                        # drop the 6 pad lanes


def _reference(x, w1, w2):
    """Pure-JAX reference of the PyTorch forward for verification."""
    B = x.shape[0]
    xi = x.reshape(B, 1, 28, 28).astype(jnp.float32)
    h = lax.conv_general_dilated(xi, w1.astype(jnp.float32), (1, 1), "VALID",
                                 dimension_numbers=("NCHW", "OIHW", "NCHW"),
                                 precision=lax.Precision.HIGHEST)
    h = lax.conv_general_dilated(h, w2.astype(jnp.float32), (1, 1), "VALID",
                                 dimension_numbers=("NCHW", "OIHW", "NCHW"),
                                 precision=lax.Precision.HIGHEST)
    logits = h.reshape(B, NCLS)
    return jax.nn.log_softmax(logits, axis=1)


if __name__ == "__main__":
    key = jax.random.PRNGKey(0)
    kx, k1, k2 = jax.random.split(key, 3)

    # Deterministic kaiming-uniform-style init matching nn.Conv2d weight shapes (bias=False).
    fan_in1 = 1 * 27 * 27
    w1 = jax.random.uniform(k1, (27, 1, 27, 27), jnp.float32, -1.0, 1.0) / jnp.sqrt(fan_in1)
    fan_in2 = 27 * 2 * 2
    w2 = jax.random.uniform(k2, (10, 27, 2, 2), jnp.float32, -1.0, 1.0) / jnp.sqrt(fan_in2)

    # B=2: single full-dim tile.  B=20: multi-tile grid with a ragged last tile.
    for B in (2, 20):
        x = jax.random.normal(jax.random.fold_in(kx, B), (B, 784), dtype=jnp.float32)
        out = jax.block_until_ready(conv2dsigmoid_5_forward(x, w1, w2))
        ref = _reference(x, w1, w2)
        assert out.shape == (B, NCLS)
        if not jnp.allclose(out, ref, atol=2e-4, rtol=2e-4):
            raise AssertionError(f"Pallas kernel output mismatches JAX reference (B={B})")
    print("KERNEL_OK")
</pallas_src>

<mosaic_0001>
module attributes {stable_mosaic.version = 11 : i64} {
  func.func @_kernel(%arg0: i32, %arg1: memref<2x784xf32, #tpu.memory_space<vmem>>, %arg2: memref<784x16xf32, #tpu.memory_space<vmem>>, %arg3: memref<2x16xf32, #tpu.memory_space<vmem>>) attributes {dimension_semantics = [#tpu.dimension_semantics<parallel>], iteration_bounds = array<i64: 1>, scalar_prefetch = 0 : i64, scratch_operands = 0 : i64, tpu.core_type = #tpu.core_type<tc>, window_params = [{transform_indices = @transform_0, window_bounds = array<i64: 2, 784>}, {pipeline_mode = #tpu.pipeline_mode<synchronous>, transform_indices = @transform_1, window_bounds = array<i64: 784, 16>}, {transform_indices = @transform_2, window_bounds = array<i64: 2, 16>}]} {
    %c0 = arith.constant 0 : index
    %c0_0 = arith.constant 0 : index
    %0 = vector.load %arg1[%c0, %c0_0] : memref<2x784xf32, #tpu.memory_space<vmem>>, vector<2x784xf32>
    %c0_1 = arith.constant 0 : index
    %c0_2 = arith.constant 0 : index
    %1 = vector.load %arg2[%c0_1, %c0_2] : memref<784x16xf32, #tpu.memory_space<vmem>>, vector<784x16xf32>
    %2 = arith.truncf %0 : vector<2x784xf32> to vector<2x784xbf16>
    %3 = arith.extf %2 : vector<2x784xbf16> to vector<2x784xf32>
    %4 = arith.subf %0, %3 : vector<2x784xf32>
    %5 = arith.truncf %4 : vector<2x784xf32> to vector<2x784xbf16>
    %6 = arith.truncf %1 : vector<784x16xf32> to vector<784x16xbf16>
    %7 = arith.extf %6 : vector<784x16xbf16> to vector<784x16xf32>
    %8 = arith.subf %1, %7 : vector<784x16xf32>
    %9 = arith.truncf %8 : vector<784x16xf32> to vector<784x16xbf16>
    %cst = arith.constant dense<0.000000e+00> : vector<2x16xf32>
    %10 = tpu.matmul %2, %6, %cst {dimension_numbers = #tpu.dot_dimension_numbers<[1], [0], [0], [1], [0, 0, 1, 1], [], []>} : vector<2x784xbf16>, vector<784x16xbf16>, vector<2x16xf32> -> vector<2x16xf32>
    %cst_3 = arith.constant dense<0.000000e+00> : vector<2x16xf32>
    %11 = tpu.matmul %5, %6, %cst_3 {dimension_numbers = #tpu.dot_dimension_numbers<[1], [0], [0], [1], [0, 0, 1, 1], [], []>} : vector<2x784xbf16>, vector<784x16xbf16>, vector<2x16xf32> -> vector<2x16xf32>
    %12 = arith.addf %10, %11 : vector<2x16xf32>
    %cst_4 = arith.constant dense<0.000000e+00> : vector<2x16xf32>
    %13 = tpu.matmul %2, %9, %cst_4 {dimension_numbers = #tpu.dot_dimension_numbers<[1], [0], [0], [1], [0, 0, 1, 1], [], []>} : vector<2x784xbf16>, vector<784x16xbf16>, vector<2x16xf32> -> vector<2x16xf32>
    %14 = arith.addf %12, %13 : vector<2x16xf32>
    %15 = tpu.iota {dimensions = array<i32: 1>} : vector<2x16xi32>
    %c10_i32 = arith.constant 10 : i32
    %16 = vector.broadcast %c10_i32 : i32 to vector<2x16xi32>
    %17 = arith.cmpi slt, %15, %16 : vector<2x16xi32>
    %cst_5 = arith.constant 0xFF800000 : f32
    %18 = vector.broadcast %cst_5 : f32 to vector<2x16xf32>
    %19 = arith.select %17, %14, %18 : vector<2x16xi1>, vector<2x16xf32>
    %cst_6 = arith.constant dense<0xFF800000> : vector<2xf32>
    %20 = vector.multi_reduction <maximumf>, %19, %cst_6 [1] : vector<2x16xf32> to vector<2xf32>
    %21 = vector.shape_cast %20 : vector<2xf32> to vector<2x1xf32>
    %22 = vector.broadcast %21 : vector<2x1xf32> to vector<2x16xf32>
    %23 = arith.subf %14, %22 : vector<2x16xf32>
    %24 = math.exp %23 : vector<2x16xf32>
    %cst_7 = arith.constant 0.000000e+00 : f32
    %25 = vector.broadcast %cst_7 : f32 to vector<2x16xf32>
    %26 = arith.select %17, %24, %25 : vector<2x16xi1>, vector<2x16xf32>
    %cst_8 = arith.constant dense<0.000000e+00> : vector<2xf32>
    %27 = vector.multi_reduction <add>, %26, %cst_8 [1] : vector<2x16xf32> to vector<2xf32>
    %28 = vector.shape_cast %27 : vector<2xf32> to vector<2x1xf32>
    %29 = math.log %28 : vector<2x1xf32>
    %30 = vector.broadcast %29 : vector<2x1xf32> to vector<2x16xf32>
    %31 = arith.subf %23, %30 : vector<2x16xf32>
    %c0_9 = arith.constant 0 : index
    %c0_10 = arith.constant 0 : index
    %32 = vector.load %arg3[%c0_9, %c0_10] : memref<2x16xf32, #tpu.memory_space<vmem>>, vector<2x16xf32>
    tpu.vector_store %arg3[%c0_9, %c0_10], %31 {strides = array<i32>} : memref<2x16xf32, #tpu.memory_space<vmem>>, vector<2x16xf32>,
    return
  }
  func.func @transform_0(%arg0: i32) -> (i32, i32) {
    %c0_i32 = arith.constant 0 : i32
    %c0_i32_0 = arith.constant 0 : i32
    return %arg0, %c0_i32 : i32, i32
  }
  func.func @transform_1(%arg0: i32) -> (i32, i32) {
    %c0_i32 = arith.constant 0 : i32
    %c0_i32_0 = arith.constant 0 : i32
    %c0_i32_1 = arith.constant 0 : i32
    return %c0_i32, %c0_i32_0 : i32, i32
  }
  func.func @transform_2(%arg0: i32) -> (i32, i32) {
    %c0_i32 = arith.constant 0 : i32
    %c0_i32_0 = arith.constant 0 : i32
    return %arg0, %c0_i32 : i32, i32
  }
}

</mosaic_0001>

<llo_original>
// kernel: conv2dsigmoid_5_forward.1
$region0: #{conv2dsigmoid_5_forward.1}
  #allocation0 [shape = 'u32[]', space=smem, size = 0x4, offset = 0x4, fixed_abs, tag = 'smem constant byte address 0x4 - core index']
  #allocation1 [shape = 'u32[72,128]{1,0:T(1,128)}', space=vmem, size = 0x9000, scoped, tag = 'internal scratch']
  %s0 = inlined_call_operand.vmem [shape: f32[2,784], index: 0, kind: input, shape index: {}]
  %s1 = inlined_call_operand.vmem [shape: f32[784,16], index: 1, kind: input, shape index: {}]
  %s2 = inlined_call_operand.hbm [shape: f32[2,16], index: 2, kind: output, shape index: {}]
  %s3 = sld [smem:[#allocation0]]
  $region18: #{conv2dsigmoid_5_forward.1} parent=0
    _
  %s5 = ssub.s32 1, %s3
  %s6 = scalar_select 0, %s5, %s3
  $region1: #{conv2dsigmoid_5_forward.1} parent=0
    #allocation2 [shape = 'u8[1024]{0}', space=vmem, size = 0x400, scoped, tag = 'output window, operand 0, single buffered']
    #allocation3 [shape = 's32[1]{0}', space=sflag, size = 0x4, scoped, tag = 'scoped memory for conv2dsigmoid_5_forward.1']
    %7 = vsyncpa [#allocation3], 0
    // Predicated region
    $region2: #{conv2dsigmoid_5_forward.1} parent=1 // pred_check
      _
    $region3: #{conv2dsigmoid_5_forward.1} parent=1 // pred_check_branch
      %9 = sbr.rel (0) target = $region5
    $region4: #{conv2dsigmoid_5_forward.1} parent=1 // pred_region
      _
    $region5: #{conv2dsigmoid_5_forward.1} parent=1 // pred_fallthru
      _
    // Predicated region
    $region6: #{conv2dsigmoid_5_forward.1} parent=1 // pred_check
      _
    $region7: #{conv2dsigmoid_5_forward.1} parent=1 // pred_check_branch
      %11 = sbr.rel (0) target = $region9
    $region8: #{conv2dsigmoid_5_forward.1} parent=1 // pred_region
      _
    $region9: #{conv2dsigmoid_5_forward.1} parent=1 // pred_fallthru
      _
    %v13 = vld [vmem:[%s0] sm:$0xff]
    %v14 = vld [vmem:[%s0 + $0x8] sm:$0x3f]
    %v15 = vld [vmem:[%s1] sm:$0xff]
    %v16 = vld [vmem:[%s1 + $0x8] sm:$0xff]
    %v17 = vld [vmem:[%s1 + $0x10] sm:$0xff]
    %v18 = vld [vmem:[%s1 + $0x18] sm:$0xff]
    %v19 = vld [vmem:[%s1 + $0x20] sm:$0xff]
    %v20 = vld [vmem:[%s1 + $0x28] sm:$0xff]
    %v21 = vld [vmem:[%s1 + $0x30] sm:$0xff]
    %v22 = vld [vmem:[%s1 + $0x38] sm:$0xff]
    %v23 = vld [vmem:[%s1 + $0x40] sm:$0xff]
    %v24 = vld [vmem:[%s1 + $0x48] sm:$0xff]
    %v25 = vld [vmem:[%s1 + $0x50] sm:$0xff]
    %v26 = vld [vmem:[%s1 + $0x58] sm:$0xff]
    %v27 = vld [vmem:[%s1 + $0x60] sm:$0xff]
    %v28 = vld [vmem:[%s1 + $0x68] sm:$0xff]
    %v29 = vld [vmem:[%s1 + $0x70] sm:$0xff]
    %v30 = vld [vmem:[%s1 + $0x78] sm:$0xff]
    %v31 = vld [vmem:[%s1 + $0x80] sm:$0xff]
    %v32 = vld [vmem:[%s1 + $0x88] sm:$0xff]
    %v33 = vld [vmem:[%s1 + $0x90] sm:$0xff]
    %v34 = vld [vmem:[%s1 + $0x98] sm:$0xff]
    %v35 = vld [vmem:[%s1 + $0xa0] sm:$0xff]
    %v36 = vld [vmem:[%s1 + $0xa8] sm:$0xff]
    %v37 = vld [vmem:[%s1 + $0xb0] sm:$0xff]
    %v38 = vld [vmem:[%s1 + $0xb8] sm:$0xff]
    %v39 = vld [vmem:[%s1 + $0xc0] sm:$0xff]
    %v40 = vld [vmem:[%s1 + $0xc8] sm:$0xff]
    %v41 = vld [vmem:[%s1 + $0xd0] sm:$0xff]
    %v42 = vld [vmem:[%s1 + $0xd8] sm:$0xff]
    %v43 = vld [vmem:[%s1 + $0xe0] sm:$0xff]
    %v44 = vld [vmem:[%s1 + $0xe8] sm:$0xff]
    %v45 = vld [vmem:[%s1 + $0xf0] sm:$0xff]
    %v46 = vld [vmem:[%s1 + $0xf8] sm:$0xff]
    %v47 = vld [vmem:[%s1 + $0x100] sm:$0xff]
    %v48 = vld [vmem:[%s1 + $0x108] sm:$0xff]
    %v49 = vld [vmem:[%s1 + $0x110] sm:$0xff]
    %v50 = vld [vmem:[%s1 + $0x118] sm:$0xff]
    %v51 = vld [vmem:[%s1 + $0x120] sm:$0xff]
    %v52 = vld [vmem:[%s1 + $0x128] sm:$0xff]
    %v53 = vld [vmem:[%s1 + $0x130] sm:$0xff]
    %v54 = vld [vmem:[%s1 + $0x138] sm:$0xff]
    %v55 = vld [vmem:[%s1 + $0x140] sm:$0xff]
    %v56 = vld [vmem:[%s1 + $0x148] sm:$0xff]
    %v57 = vld [vmem:[%s1 + $0x150] sm:$0xff]
    %v58 = vld [vmem:[%s1 + $0x158] sm:$0xff]
    %v59 = vld [vmem:[%s1 + $0x160] sm:$0xff]
    %v60 = vld [vmem:[%s1 + $0x168] sm:$0xff]
    %v61 = vld [vmem:[%s1 + $0x170] sm:$0xff]
    %v62 = vld [vmem:[%s1 + $0x178] sm:$0xff]
    %v63 = vld [vmem:[%s1 + $0x180] sm:$0xff]
    %v64 = vld [vmem:[%s1 + $0x188] sm:$0xff]
    %v65 = vld [vmem:[%s1 + $0x190] sm:$0xff]
    %v66 = vld [vmem:[%s1 + $0x198] sm:$0xff]
    %v67 = vld [vmem:[%s1 + $0x1a0] sm:$0xff]
    %v68 = vld [vmem:[%s1 + $0x1a8] sm:$0xff]
    %v69 = vld [vmem:[%s1 + $0x1b0] sm:$0xff]
    %v70 = vld [vmem:[%s1 + $0x1b8] sm:$0xff]
    %v71 = vld [vmem:[%s1 + $0x1c0] sm:$0xff]
    %v72 = vld [vmem:[%s1 + $0x1c8] sm:$0xff]
    %v73 = vld [vmem:[%s1 + $0x1d0] sm:$0xff]
    %v74 = vld [vmem:[%s1 + $0x1d8] sm:$0xff]
    %v75 = vld [vmem:[%s1 + $0x1e0] sm:$0xff]
    %v76 = vld [vmem:[%s1 + $0x1e8] sm:$0xff]
    %v77 = vld [vmem:[%s1 + $0x1f0] sm:$0xff]
    %v78 = vld [vmem:[%s1 + $0x1f8] sm:$0xff]
    %v79 = vld [vmem:[%s1 + $0x200] sm:$0xff]
    %v80 = vld [vmem:[%s1 + $0x208] sm:$0xff]
    %v81 = vld [vmem:[%s1 + $0x210] sm:$0xff]
    %v82 = vld [vmem:[%s1 + $0x218] sm:$0xff]
    %v83 = vld [vmem:[%s1 + $0x220] sm:$0xff]
    %v84 = vld [vmem:[%s1 + $0x228] sm:$0xff]
    %v85 = vld [vmem:[%s1 + $0x230] sm:$0xff]
    %v86 = vld [vmem:[%s1 + $0x238] sm:$0xff]
    %v87 = vld [vmem:[%s1 + $0x240] sm:$0xff]
    %v88 = vld [vmem:[%s1 + $0x248] sm:$0xff]
    %v89 = vld [vmem:[%s1 + $0x250] sm:$0xff]
    %v90 = vld [vmem:[%s1 + $0x258] sm:$0xff]
    %v91 = vld [vmem:[%s1 + $0x260] sm:$0xff]
    %v92 = vld [vmem:[%s1 + $0x268] sm:$0xff]
    %v93 = vld [vmem:[%s1 + $0x270] sm:$0xff]
    %v94 = vld [vmem:[%s1 + $0x278] sm:$0xff]
    %v95 = vld [vmem:[%s1 + $0x280] sm:$0xff]
    %v96 = vld [vmem:[%s1 + $0x288] sm:$0xff]
    %v97 = vld [vmem:[%s1 + $0x290] sm:$0xff]
    %v98 = vld [vmem:[%s1 + $0x298] sm:$0xff]
    %v99 = vld [vmem:[%s1 + $0x2a0] sm:$0xff]
    %v100 = vld [vmem:[%s1 + $0x2a8] sm:$0xff]
    %v101 = vld [vmem:[%s1 + $0x2b0] sm:$0xff]
    %v102 = vld [vmem:[%s1 + $0x2b8] sm:$0xff]
    %v103 = vld [vmem:[%s1 + $0x2c0] sm:$0xff]
    %v104 = vld [vmem:[%s1 + $0x2c8] sm:$0xff]
    %v105 = vld [vmem:[%s1 + $0x2d0] sm:$0xff]
    %v106 = vld [vmem:[%s1 + $0x2d8] sm:$0xff]
    %v107 = vld [vmem:[%s1 + $0x2e0] sm:$0xff]
    %v108 = vld [vmem:[%s1 + $0x2e8] sm:$0xff]
    %v109 = vld [vmem:[%s1 + $0x2f0] sm:$0xff]
    %v110 = vld [vmem:[%s1 + $0x2f8] sm:$0xff]
    %v111 = vld [vmem:[%s1 + $0x300] sm:$0xff]
    %v112 = vld [vmem:[%s1 + $0x308] sm:$0xff]
    %115 = vst [vmem:[#allocation1] ss:$4 sm:$0xff] %v13
    %s116 = scalar_lea.vmem [#allocation1], 32
    %117 = vst [vmem:[%s116] ss:$4 sm:$0xff] %v14
    %v118 = vld.sshfl [vmem:[#allocation1] sm:$0xff pattern:$0x73625140]
    %v119 = vld.sshfl [vmem:[#allocation1 + $0x8] sm:$0xff pattern:$0x73625140]
    %v120 = vld.sshfl [vmem:[#allocation1 + $0x10] sm:$0xff pattern:$0x73625140]
    %v121 = vld.sshfl [vmem:[#allocation1 + $0x18] sm:$0xff pattern:$0x73625140]
    %v122 = vld.sshfl [vmem:[#allocation1 + $0x20] sm:$0xff pattern:$0x73625140]
    %v123 = vld.sshfl [vmem:[#allocation1 + $0x28] sm:$0xff pattern:$0x73625140]
    %v124 = vld.sshfl [vmem:[#allocation1 + $0x30] sm:$0xff pattern:$0x73625140]
    %v132 = vpack.c.bf16 %v119, %v118
    %v133 = vpack.c.bf16 %v121, %v120
    %v134 = vpack.c.bf16 %v123, %v122
    %v135 = vpack.c.bf16 %v124, %v124
    %v136 = vunpack.c.l.bf16 %v132
    %v137 = vunpack.c.h.bf16 %v132
    %v138 = vunpack.c.l.bf16 %v133
    %v139 = vunpack.c.h.bf16 %v133
    %v140 = vunpack.c.l.bf16 %v134
    %v141 = vunpack.c.h.bf16 %v134
    %v142 = vunpack.c.l.bf16 %v135
    %v150 = vrot.slane %v137, 6
    %v151 = vrot.slane %v138, 4
    %v152 = vrot.slane %v139, 2
    %v153 = vrot.slane %v141, 6
    %v154 = vrot.slane %v142, 4
    %vm155 = vcmask 1041408
    %v156 = vsel %vm155, %v136, %v150
    %vm157 = vcmask 1045508
    %v158 = vsel %vm157, %v151, %v152
    %vm159 = vcmask 1043456
    %v160 = vsel %vm159, %v156, %v158
    %v161 = vsel %vm155, %v140, %v153
    %v162 = vsel %vm159, %v161, %v154
    %v165 = vsub.f32 %v13, %v160
    %v166 = vsub.f32 %v14, %v162
    %169 = vst [vmem:[#allocation1] ss:$4 sm:$0xff] %v165
    %s170 = scalar_lea.vmem [#allocation1], 32
    %171 = vst [vmem:[%s170] ss:$4 sm:$0xff] %v166
    %v172 = vld.sshfl [vmem:[#allocation1] sm:$0xff pattern:$0x73625140]
    %v173 = vld.sshfl [vmem:[#allocation1 + $0x8] sm:$0xff pattern:$0x73625140]
    %v174 = vld.sshfl [vmem:[#allocation1 + $0x10] sm:$0xff pattern:$0x73625140]
    %v175 = vld.sshfl [vmem:[#allocation1 + $0x18] sm:$0xff pattern:$0x73625140]
    %v176 = vld.sshfl [vmem:[#allocation1 + $0x20] sm:$0xff pattern:$0x73625140]
    %v177 = vld.sshfl [vmem:[#allocation1 + $0x28] sm:$0xff pattern:$0x73625140]
    %v178 = vld.sshfl [vmem:[#allocation1 + $0x30] sm:$0xff pattern:$0x73625140]
    %v186 = vpack.c.bf16 %v172, %v172
    %v187 = vpack.c.bf16 %v173, %v173
    %v188 = vpack.c.bf16 %v174, %v174
    %v189 = vpack.c.bf16 %v175, %v175
    %v190 = vpack.c.bf16 %v176, %v176
    %v191 = vpack.c.bf16 %v177, %v177
    %v192 = vpack.c.bf16 %v178, %v178
    %v193 = vpack.c.bf16 %v15, %v15
    %v194 = vpack.c.bf16 %v16, %v16
    %v195 = vpack.c.bf16 %v17, %v17
    %v196 = vpack.c.bf16 %v18, %v18
    %v197 = vpack.c.bf16 %v19, %v19
    %v198 = vpack.c.bf16 %v20, %v20
    %v199 = vpack.c.bf16 %v21, %v21
    %v200 = vpack.c.bf16 %v22, %v22
    %v201 = vpack.c.bf16 %v23, %v23
    %v202 = vpack.c.bf16 %v24, %v24
    %v203 = vpack.c.bf16 %v25, %v25
    %v204 = vpack.c.bf16 %v26, %v26
    %v205 = vpack.c.bf16 %v27, %v27
    %v206 = vpack.c.bf16 %v28, %v28
    %v207 = vpack.c.bf16 %v29, %v29
    %v208 = vpack.c.bf16 %v30, %v30
    %v209 = vpack.c.bf16 %v31, %v31
    %v210 = vpack.c.bf16 %v32, %v32
    %v211 = vpack.c.bf16 %v33, %v33
    %v212 = vpack.c.bf16 %v34, %v34
    %v213 = vpack.c.bf16 %v35, %v35
    %v214 = vpack.c.bf16 %v36, %v36
    %v215 = vpack.c.bf16 %v37, %v37
    %v216 = vpack.c.bf16 %v38, %v38
    %v217 = vpack.c.bf16 %v39, %v39
    %v218 = vpack.c.bf16 %v40, %v40
    %v219 = vpack.c.bf16 %v41, %v41
    %v220 = vpack.c.bf16 %v42, %v42
    %v221 = vpack.c.bf16 %v43, %v43
    %v222 = vpack.c.bf16 %v44, %v44
    %v223 = vpack.c.bf16 %v45, %v45
    %v224 = vpack.c.bf16 %v46, %v46
    %v225 = vpack.c.bf16 %v47, %v47
    %v226 = vpack.c.bf16 %v48, %v48
    %v227 = vpack.c.bf16 %v49, %v49
    %v228 = vpack.c.bf16 %v50, %v50
    %v229 = vpack.c.bf16 %v51, %v51
    %v230 = vpack.c.bf16 %v52, %v52
    %v231 = vpack.c.bf16 %v53, %v53
    %v232 = vpack.c.bf16 %v54, %v54
    %v233 = vpack.c.bf16 %v55, %v55
    %v234 = vpack.c.bf16 %v56, %v56
    %v235 = vpack.c.bf16 %v57, %v57
    %v236 = vpack.c.bf16 %v58, %v58
    %v237 = vpack.c.bf16 %v59, %v59
    %v238 = vpack.c.bf16 %v60, %v60
    %v239 = vpack.c.bf16 %v61, %v61
    %v240 = vpack.c.bf16 %v62, %v62
    %v241 = vpack.c.bf16 %v63, %v63
    %v242 = vpack.c.bf16 %v64, %v64
    %v243 = vpack.c.bf16 %v65, %v65
    %v244 = vpack.c.bf16 %v66, %v66
    %v245 = vpack.c.bf16 %v67, %v67
    %v246 = vpack.c.bf16 %v68, %v68
    %v247 = vpack.c.bf16 %v69, %v69
    %v248 = vpack.c.bf16 %v70, %v70
    %v249 = vpack.c.bf16 %v71, %v71
    %v250 = vpack.c.bf16 %v72, %v72
    %v251 = vpack.c.bf16 %v73, %v73
    %v252 = vpack.c.bf16 %v74, %v74
    %v253 = vpack.c.bf16 %v75, %v75
    %v254 = vpack.c.bf16 %v76, %v76
    %v255 = vpack.c.bf16 %v77, %v77
    %v256 = vpack.c.bf16 %v78, %v78
    %v257 = vpack.c.bf16 %v79, %v79
    %v258 = vpack.c.bf16 %v80, %v80
    %v259 = vpack.c.bf16 %v81, %v81
    %v260 = vpack.c.bf16 %v82, %v82
    %v261 = vpack.c.bf16 %v83, %v83
    %v262 = vpack.c.bf16 %v84, %v84
    %v263 = vpack.c.bf16 %v85, %v85
    %v264 = vpack.c.bf16 %v86, %v86
    %v265 = vpack.c.bf16 %v87, %v87
    %v266 = vpack.c.bf16 %v88, %v88
    %v267 = vpack.c.bf16 %v89, %v89
    %v268 = vpack.c.bf16 %v90, %v90
    %v269 = vpack.c.bf16 %v91, %v91
    %v270 = vpack.c.bf16 %v92, %v92
    %v271 = vpack.c.bf16 %v93, %v93
    %v272 = vpack.c.bf16 %v94, %v94
    %v273 = vpack.c.bf16 %v95, %v95
    %v274 = vpack.c.bf16 %v96, %v96
    %v275 = vpack.c.bf16 %v97, %v97
    %v276 = vpack.c.bf16 %v98, %v98
    %v277 = vpack.c.bf16 %v99, %v99
    %v278 = vpack.c.bf16 %v100, %v100
    %v279 = vpack.c.bf16 %v101, %v101
    %v280 = vpack.c.bf16 %v102, %v102
    %v281 = vpack.c.bf16 %v103, %v103
    %v282 = vpack.c.bf16 %v104, %v104
    %v283 = vpack.c.bf16 %v105, %v105
    %v284 = vpack.c.bf16 %v106, %v106
    %v285 = vpack.c.bf16 %v107, %v107
    %v286 = vpack.c.bf16 %v108, %v108
    %v287 = vpack.c.bf16 %v109, %v109
    %v288 = vpack.c.bf16 %v110, %v110
    %v289 = vpack.c.bf16 %v111, %v111
    %v290 = vpack.c.bf16 %v112, %v112
    %v291 = vunpack.c.l.bf16 %v193
    %v292 = vunpack.c.l.bf16 %v194
    %v293 = vunpack.c.l.bf16 %v195
    %v294 = vunpack.c.l.bf16 %v196
    %v295 = vunpack.c.l.bf16 %v197
    %v296 = vunpack.c.l.bf16 %v198
    %v297 = vunpack.c.l.bf16 %v199
    %v298 = vunpack.c.l.bf16 %v200
    %v299 = vunpack.c.l.bf16 %v201
    %v300 = vunpack.c.l.bf16 %v202
    %v301 = vunpack.c.l.bf16 %v203
    %v302 = vunpack.c.l.bf16 %v204
    %v303 = vunpack.c.l.bf16 %v205
    %v304 = vunpack.c.l.bf16 %v206
    %v305 = vunpack.c.l.bf16 %v207
    %v306 = vunpack.c.l.bf16 %v208
    %v307 = vunpack.c.l.bf16 %v209
    %v308 = vunpack.c.l.bf16 %v210
    %v309 = vunpack.c.l.bf16 %v211
    %v310 = vunpack.c.l.bf16 %v212
    %v311 = vunpack.c.l.bf16 %v213
    %v312 = vunpack.c.l.bf16 %v214
    %v313 = vunpack.c.l.bf16 %v215
    %v314 = vunpack.c.l.bf16 %v216
    %v315 = vunpack.c.l.bf16 %v217
    %v316 = vunpack.c.l.bf16 %v218
    %v317 = vunpack.c.l.bf16 %v219
    %v318 = vunpack.c.l.bf16 %v220
    %v319 = vunpack.c.l.bf16 %v221
    %v320 = vunpack.c.l.bf16 %v222
    %v321 = vunpack.c.l.bf16 %v223
    %v322 = vunpack.c.l.bf16 %v224
    %v323 = vunpack.c.l.bf16 %v225
    %v324 = vunpack.c.l.bf16 %v226
    %v325 = vunpack.c.l.bf16 %v227
    %v326 = vunpack.c.l.bf16 %v228
    %v327 = vunpack.c.l.bf16 %v229
    %v328 = vunpack.c.l.bf16 %v230
    %v329 = vunpack.c.l.bf16 %v231
    %v330 = vunpack.c.l.bf16 %v232
    %v331 = vunpack.c.l.bf16 %v233
    %v332 = vunpack.c.l.bf16 %v234
    %v333 = vunpack.c.l.bf16 %v235
    %v334 = vunpack.c.l.bf16 %v236
    %v335 = vunpack.c.l.bf16 %v237
    %v336 = vunpack.c.l.bf16 %v238
    %v337 = vunpack.c.l.bf16 %v239
    %v338 = vunpack.c.l.bf16 %v240
    %v339 = vunpack.c.l.bf16 %v241
    %v340 = vunpack.c.l.bf16 %v242
    %v341 = vunpack.c.l.bf16 %v243
    %v342 = vunpack.c.l.bf16 %v244
    %v343 = vunpack.c.l.bf16 %v245
    %v344 = vunpack.c.l.bf16 %v246
    %v345 = vunpack.c.l.bf16 %v247
    %v346 = vunpack.c.l.bf16 %v248
    %v347 = vunpack.c.l.bf16 %v249
    %v348 = vunpack.c.l.bf16 %v250
    %v349 = vunpack.c.l.bf16 %v251
    %v350 = vunpack.c.l.bf16 %v252
    %v351 = vunpack.c.l.bf16 %v253
    %v352 = vunpack.c.l.bf16 %v254
    %v353 = vunpack.c.l.bf16 %v255
    %v354 = vunpack.c.l.bf16 %v256
    %v355 = vunpack.c.l.bf16 %v257
    %v356 = vunpack.c.l.bf16 %v258
    %v357 = vunpack.c.l.bf16 %v259
    %v358 = vunpack.c.l.bf16 %v260
    %v359 = vunpack.c.l.bf16 %v261
    %v360 = vunpack.c.l.bf16 %v262
    %v361 = vunpack.c.l.bf16 %v263
    %v362 = vunpack.c.l.bf16 %v264
    %v363 = vunpack.c.l.bf16 %v265
    %v364 = vunpack.c.l.bf16 %v266
    %v365 = vunpack.c.l.bf16 %v267
    %v366 = vunpack.c.l.bf16 %v268
    %v367 = vunpack.c.l.bf16 %v269
    %v368 = vunpack.c.l.bf16 %v270
    %v369 = vunpack.c.l.bf16 %v271
    %v370 = vunpack.c.l.bf16 %v272
    %v371 = vunpack.c.l.bf16 %v273
    %v372 = vunpack.c.l.bf16 %v274
    %v373 = vunpack.c.l.bf16 %v275
    %v374 = vunpack.c.l.bf16 %v276
    %v375 = vunpack.c.l.bf16 %v277
    %v376 = vunpack.c.l.bf16 %v278
    %v377 = vunpack.c.l.bf16 %v279
    %v378 = vunpack.c.l.bf16 %v280
    %v379 = vunpack.c.l.bf16 %v281
    %v380 = vunpack.c.l.bf16 %v282
    %v381 = vunpack.c.l.bf16 %v283
    %v382 = vunpack.c.l.bf16 %v284
    %v383 = vunpack.c.l.bf16 %v285
    %v384 = vunpack.c.l.bf16 %v286
    %v385 = vunpack.c.l.bf16 %v287
    %v386 = vunpack.c.l.bf16 %v288
    %v387 = vunpack.c.l.bf16 %v289
    %v388 = vunpack.c.l.bf16 %v290
    %v389 = vsub.f32 %v15, %v291
    %v390 = vsub.f32 %v16, %v292
    %v391 = vsub.f32 %v17, %v293
    %v392 = vsub.f32 %v18, %v294
    %v393 = vsub.f32 %v19, %v295
    %v394 = vsub.f32 %v20, %v296
    %v395 = vsub.f32 %v21, %v297
    %v396 = vsub.f32 %v22, %v298
    %v397 = vsub.f32 %v23, %v299
    %v398 = vsub.f32 %v24, %v300
    %v399 = vsub.f32 %v25, %v301
    %v400 = vsub.f32 %v26, %v302
    %v401 = vsub.f32 %v27, %v303
    %v402 = vsub.f32 %v28, %v304
    %v403 = vsub.f32 %v29, %v305
    %v404 = vsub.f32 %v30, %v306
    %v405 = vsub.f32 %v31, %v307
    %v406 = vsub.f32 %v32, %v308
    %v407 = vsub.f32 %v33, %v309
    %v408 = vsub.f32 %v34, %v310
    %v409 = vsub.f32 %v35, %v311
    %v410 = vsub.f32 %v36, %v312
    %v411 = vsub.f32 %v37, %v313
    %v412 = vsub.f32 %v38, %v314
    %v413 = vsub.f32 %v39, %v315
    %v414 = vsub.f32 %v40, %v316
    %v415 = vsub.f32 %v41, %v317
    %v416 = vsub.f32 %v42, %v318
    %v417 = vsub.f32 %v43, %v319
    %v418 = vsub.f32 %v44, %v320
    %v419 = vsub.f32 %v45, %v321
    %v420 = vsub.f32 %v46, %v322
    %v421 = vsub.f32 %v47, %v323
    %v422 = vsub.f32 %v48, %v324
    %v423 = vsub.f32 %v49, %v325
    %v424 = vsub.f32 %v50, %v326
    %v425 = vsub.f32 %v51, %v327
    %v426 = vsub.f32 %v52, %v328
    %v427 = vsub.f32 %v53, %v329
    %v428 = vsub.f32 %v54, %v330
    %v429 = vsub.f32 %v55, %v331
    %v430 = vsub.f32 %v56, %v332
    %v431 = vsub.f32 %v57, %v333
    %v432 = vsub.f32 %v58, %v334
    %v433 = vsub.f32 %v59, %v335
    %v434 = vsub.f32 %v60, %v336
    %v435 = vsub.f32 %v61, %v337
    %v436 = vsub.f32 %v62, %v338
    %v437 = vsub.f32 %v63, %v339
    %v438 = vsub.f32 %v64, %v340
    %v439 = vsub.f32 %v65, %v341
    %v440 = vsub.f32 %v66, %v342
    %v441 = vsub.f32 %v67, %v343
    %v442 = vsub.f32 %v68, %v344
    %v443 = vsub.f32 %v69, %v345
    %v444 = vsub.f32 %v70, %v346
    %v445 = vsub.f32 %v71, %v347
    %v446 = vsub.f32 %v72, %v348
    %v447 = vsub.f32 %v73, %v349
    %v448 = vsub.f32 %v74, %v350
    %v449 = vsub.f32 %v75, %v351
    %v450 = vsub.f32 %v76, %v352
    %v451 = vsub.f32 %v77, %v353
    %v452 = vsub.f32 %v78, %v354
    %v453 = vsub.f32 %v79, %v355
    %v454 = vsub.f32 %v80, %v356
    %v455 = vsub.f32 %v81, %v357
    %v456 = vsub.f32 %v82, %v358
    %v457 = vsub.f32 %v83, %v359
    %v458 = vsub.f32 %v84, %v360
    %v459 = vsub.f32 %v85, %v361
    %v460 = vsub.f32 %v86, %v362
    %v461 = vsub.f32 %v87, %v363
    %v462 = vsub.f32 %v88, %v364
    %v463 = vsub.f32 %v89, %v365
    %v464 = vsub.f32 %v90, %v366
    %v465 = vsub.f32 %v91, %v367
    %v466 = vsub.f32 %v92, %v368
    %v467 = vsub.f32 %v93, %v369
    %v468 = vsub.f32 %v94, %v370
    %v469 = vsub.f32 %v95, %v371
    %v470 = vsub.f32 %v96, %v372
    %v471 = vsub.f32 %v97, %v373
    %v472 = vsub.f32 %v98, %v374
    %v473 = vsub.f32 %v99, %v375
    %v474 = vsub.f32 %v100, %v376
    %v475 = vsub.f32 %v101, %v377
    %v476 = vsub.f32 %v102, %v378
    %v477 = vsub.f32 %v103, %v379
    %v478 = vsub.f32 %v104, %v380
    %v479 = vsub.f32 %v105, %v381
    %v480 = vsub.f32 %v106, %v382
    %v481 = vsub.f32 %v107, %v383
    %v482 = vsub.f32 %v108, %v384
    %v483 = vsub.f32 %v109, %v385
    %v484 = vsub.f32 %v110, %v386
    %v485 = vsub.f32 %v111, %v387
    %v486 = vsub.f32 %v112, %v388
    %v487 = vpack.c.bf16 %v390, %v389
    %v488 = vpack.c.bf16 %v392, %v391
    %v489 = vpack.c.bf16 %v394, %v393
    %v490 = vpack.c.bf16 %v396, %v395
    %v491 = vpack.c.bf16 %v398, %v397
    %v492 = vpack.c.bf16 %v400, %v399
    %v493 = vpack.c.bf16 %v402, %v401
    %v494 = vpack.c.bf16 %v404, %v403
    %v495 = vpack.c.bf16 %v406, %v405
    %v496 = vpack.c.bf16 %v408, %v407
    %v497 = vpack.c.bf16 %v410, %v409
    %v498 = vpack.c.bf16 %v412, %v411
    %v499 = vpack.c.bf16 %v414, %v413
    %v500 = vpack.c.bf16 %v416, %v415
    %v501 = vpack.c.bf16 %v418, %v417
    %v502 = vpack.c.bf16 %v420, %v419
    %v503 = vpack.c.bf16 %v422, %v421
    %v504 = vpack.c.bf16 %v424, %v423
    %v505 = vpack.c.bf16 %v426, %v425
    %v506 = vpack.c.bf16 %v428, %v427
    %v507 = vpack.c.bf16 %v430, %v429
    %v508 = vpack.c.bf16 %v432, %v431
    %v509 = vpack.c.bf16 %v434, %v433
    %v510 = vpack.c.bf16 %v436, %v435
    %v511 = vpack.c.bf16 %v438, %v437
    %v512 = vpack.c.bf16 %v440, %v439
    %v513 = vpack.c.bf16 %v442, %v441
    %v514 = vpack.c.bf16 %v444, %v443
    %v515 = vpack.c.bf16 %v446, %v445
    %v516 = vpack.c.bf16 %v448, %v447
    %v517 = vpack.c.bf16 %v450, %v449
    %v518 = vpack.c.bf16 %v452, %v451
    %v519 = vpack.c.bf16 %v454, %v453
    %v520 = vpack.c.bf16 %v456, %v455
    %v521 = vpack.c.bf16 %v458, %v457
    %v522 = vpack.c.bf16 %v460, %v459
    %v523 = vpack.c.bf16 %v462, %v461
    %v524 = vpack.c.bf16 %v464, %v463
    %v525 = vpack.c.bf16 %v466, %v465
    %v526 = vpack.c.bf16 %v468, %v467
    %v527 = vpack.c.bf16 %v470, %v469
    %v528 = vpack.c.bf16 %v472, %v471
    %v529 = vpack.c.bf16 %v474, %v473
    %v530 = vpack.c.bf16 %v476, %v475
    %v531 = vpack.c.bf16 %v478, %v477
    %v532 = vpack.c.bf16 %v480, %v479
    %v533 = vpack.c.bf16 %v482, %v481
    %v534 = vpack.c.bf16 %v484, %v483
    %v535 = vpack.c.bf16 %v486, %v485
    %v634 = vunpack.c.l.b16 %v193
    %v635 = vunpack.c.l.b16 %v194
    %v636 = vunpack.c.l.b16 %v195
    %v637 = vunpack.c.l.b16 %v196
    %v638 = vunpack.c.l.b16 %v197
    %v639 = vunpack.c.l.b16 %v198
    %v640 = vunpack.c.l.b16 %v199
    %v641 = vunpack.c.l.b16 %v200
    %v642 = vunpack.c.l.b16 %v201
    %v643 = vunpack.c.l.b16 %v202
    %v644 = vunpack.c.l.b16 %v203
    %v645 = vunpack.c.l.b16 %v204
    %v646 = vunpack.c.l.b16 %v205
    %v647 = vunpack.c.l.b16 %v206
    %v648 = vunpack.c.l.b16 %v207
    %v649 = vunpack.c.l.b16 %v208
    %v650 = vunpack.c.l.b16 %v209
    %v651 = vunpack.c.l.b16 %v210
    %v652 = vunpack.c.l.b16 %v211
    %v653 = vunpack.c.l.b16 %v212
    %v654 = vunpack.c.l.b16 %v213
    %v655 = vunpack.c.l.b16 %v214
    %v656 = vunpack.c.l.b16 %v215
    %v657 = vunpack.c.l.b16 %v216
    %v658 = vunpack.c.l.b16 %v217
    %v659 = vunpack.c.l.b16 %v218
    %v660 = vunpack.c.l.b16 %v219
    %v661 = vunpack.c.l.b16 %v220
    %v662 = vunpack.c.l.b16 %v221
    %v663 = vunpack.c.l.b16 %v222
    %v664 = vunpack.c.l.b16 %v223
    %v665 = vunpack.c.l.b16 %v224
    %v666 = vunpack.c.l.b16 %v225
    %v667 = vunpack.c.l.b16 %v226
    %v668 = vunpack.c.l.b16 %v227
    %v669 = vunpack.c.l.b16 %v228
    %v670 = vunpack.c.l.b16 %v229
    %v671 = vunpack.c.l.b16 %v230
    %v672 = vunpack.c.l.b16 %v231
    %v673 = vunpack.c.l.b16 %v232
    %v674 = vunpack.c.l.b16 %v233
    %v675 = vunpack.c.l.b16 %v234
    %v676 = vunpack.c.l.b16 %v235
    %v677 = vunpack.c.l.b16 %v236
    %v678 = vunpack.c.l.b16 %v237
    %v679 = vunpack.c.l.b16 %v238
    %v680 = vunpack.c.l.b16 %v239
    %v681 = vunpack.c.l.b16 %v240
    %v682 = vunpack.c.l.b16 %v241
    %v683 = vunpack.c.l.b16 %v242
    %v684 = vunpack.c.l.b16 %v243
    %v685 = vunpack.c.l.b16 %v244
    %v686 = vunpack.c.l.b16 %v245
    %v687 = vunpack.c.l.b16 %v246
    %v688 = vunpack.c.l.b16 %v247
    %v689 = vunpack.c.l.b16 %v248
    %v690 = vunpack.c.l.b16 %v249
    %v691 = vunpack.c.l.b16 %v250
    %v692 = vunpack.c.l.b16 %v251
    %v693 = vunpack.c.l.b16 %v252
    %v694 = vunpack.c.l.b16 %v253
    %v695 = vunpack.c.l.b16 %v254
    %v696 = vunpack.c.l.b16 %v255
    %v697 = vunpack.c.l.b16 %v256
    %v698 = vunpack.c.l.b16 %v257
    %v699 = vunpack.c.l.b16 %v258
    %v700 = vunpack.c.l.b16 %v259
    %v701 = vunpack.c.l.b16 %v260
    %v702 = vunpack.c.l.b16 %v261
    %v703 = vunpack.c.l.b16 %v262
    %v704 = vunpack.c.l.b16 %v263
    %v705 = vunpack.c.l.b16 %v264
    %v706 = vunpack.c.l.b16 %v265
    %v707 = vunpack.c.l.b16 %v266
    %v708 = vunpack.c.l.b16 %v267
    %v709 = vunpack.c.l.b16 %v268
    %v710 = vunpack.c.l.b16 %v269
    %v711 = vunpack.c.l.b16 %v270
    %v712 = vunpack.c.l.b16 %v271
    %v713 = vunpack.c.l.b16 %v272
    %v714 = vunpack.c.l.b16 %v273
    %v715 = vunpack.c.l.b16 %v274
    %v716 = vunpack.c.l.b16 %v275
    %v717 = vunpack.c.l.b16 %v276
    %v718 = vunpack.c.l.b16 %v277
    %v719 = vunpack.c.l.b16 %v278
    %v720 = vunpack.c.l.b16 %v279
    %v721 = vunpack.c.l.b16 %v280
    %v722 = vunpack.c.l.b16 %v281
    %v723 = vunpack.c.l.b16 %v282
    %v724 = vunpack.c.l.b16 %v283
    %v725 = vunpack.c.l.b16 %v284
    %v726 = vunpack.c.l.b16 %v285
    %v727 = vunpack.c.l.b16 %v286
    %v728 = vunpack.c.l.b16 %v287
    %v729 = vunpack.c.l.b16 %v288
    %v730 = vunpack.c.l.b16 %v289
    %v731 = vunpack.c.l.b16 %v290
    %v732 = vpack.c.b16 %v635, %v634
    %v733 = vpack.c.b16 %v637, %v636
    %v734 = vpack.c.b16 %v639, %v638
    %v735 = vpack.c.b16 %v641, %v640
    %v736 = vpack.c.b16 %v643, %v642
    %v737 = vpack.c.b16 %v645, %v644
    %v738 = vpack.c.b16 %v647, %v646
    %v739 = vpack.c.b16 %v649, %v648
    %v740 = vpack.c.b16 %v651, %v650
    %v741 = vpack.c.b16 %v653, %v652
    %v742 = vpack.c.b16 %v655, %v654
    %v743 = vpack.c.b16 %v657, %v656
    %v744 = vpack.c.b16 %v659, %v658
    %v745 = vpack.c.b16 %v661, %v660
    %v746 = vpack.c.b16 %v663, %v662
    %v747 = vpack.c.b16 %v665, %v664
    %v748 = vpack.c.b16 %v667, %v666
    %v749 = vpack.c.b16 %v669, %v668
    %v750 = vpack.c.b16 %v671, %v670
    %v751 = vpack.c.b16 %v673, %v672
    %v752 = vpack.c.b16 %v675, %v674
    %v753 = vpack.c.b16 %v677, %v676
    %v754 = vpack.c.b16 %v679, %v678
    %v755 = vpack.c.b16 %v681, %v680
    %v756 = vpack.c.b16 %v683, %v682
    %v757 = vpack.c.b16 %v685, %v684
    %v758 = vpack.c.b16 %v687, %v686
    %v759 = vpack.c.b16 %v689, %v688
    %v760 = vpack.c.b16 %v691, %v690
    %v761 = vpack.c.b16 %v693, %v692
    %v762 = vpack.c.b16 %v695, %v694
    %v763 = vpack.c.b16 %v697, %v696
    %v764 = vpack.c.b16 %v699, %v698
    %v765 = vpack.c.b16 %v701, %v700
    %v766 = vpack.c.b16 %v703, %v702
    %v767 = vpack.c.b16 %v705, %v704
    %v768 = vpack.c.b16 %v707, %v706
    %v769 = vpack.c.b16 %v709, %v708
    %v770 = vpack.c.b16 %v711, %v710
    %v771 = vpack.c.b16 %v713, %v712
    %v772 = vpack.c.b16 %v715, %v714
    %v773 = vpack.c.b16 %v717, %v716
    %v774 = vpack.c.b16 %v719, %v718
    %v775 = vpack.c.b16 %v721, %v720
    %v776 = vpack.c.b16 %v723, %v722
    %v777 = vpack.c.b16 %v725, %v724
    %v778 = vpack.c.b16 %v727, %v726
    %v779 = vpack.c.b16 %v729, %v728
    %v780 = vpack.c.b16 %v731, %v730
    %vm830 = vcmask 130048
    %v832 = vsel %vm830, %v192, 0
    %834 = vmatpush.bf16.msra.mxu0 %v739
    %835 = vmatpush.bf16.msra.mxu0 %v738
    %836 = vmatpush.bf16.msra.mxu0 %v737
    %837 = vmatpush.bf16.msra.mxu0 %v736
    %838 = vmatpush.bf16.msra.mxu0 %v735
    %839 = vmatpush.bf16.msra.mxu0 %v734
    %840 = vmatpush.bf16.msra.mxu0 %v733
    %841 = vmatpush.bf16.msra.mxu0 %v732
    %842 = vmatmul.bf16.gmra.mxu0 %v186
    %v843 = vpop.f32.mrf.mxu0
    %v844 = vadd.f32 0.0, %v843
    %v845 = vpop.f32.mrf.mxu0
    %846 = vdwg.mxu0
    %847 = vmatpush.bf16.msra.mxu0 %v747
    %848 = vmatpush.bf16.msra.mxu0 %v746
    %849 = vmatpush.bf16.msra.mxu0 %v745
    %850 = vmatpush.bf16.msra.mxu0 %v744
    %851 = vmatpush.bf16.msra.mxu0 %v743
    %852 = vmatpush.bf16.msra.mxu0 %v742
    %853 = vmatpush.bf16.msra.mxu0 %v741
    %854 = vmatpush.bf16.msra.mxu0 %v740
    %855 = vmatmul.bf16.gmra.mxu0 %v187
    %v856 = vpop.f32.mrf.mxu0
    %v857 = vadd.f32 %v844, %v856
    %v858 = vpop.f32.mrf.mxu0
    %859 = vdwg.mxu0
    %860 = vmatpush.bf16.msra.mxu0 %v755
    %861 = vmatpush.bf16.msra.mxu0 %v754
    %862 = vmatpush.bf16.msra.mxu0 %v753
    %863 = vmatpush.bf16.msra.mxu0 %v752
    %864 = vmatpush.bf16.msra.mxu0 %v751
    %865 = vmatpush.bf16.msra.mxu0 %v750
    %866 = vmatpush.bf16.msra.mxu0 %v749
    %867 = vmatpush.bf16.msra.mxu0 %v748
    %868 = vmatmul.bf16.gmra.mxu0 %v188
    %v869 = vpop.f32.mrf.mxu0
    %v870 = vadd.f32 %v857, %v869
    %v871 = vpop.f32.mrf.mxu0
    %872 = vdwg.mxu0
    %873 = vmatpush.bf16.msra.mxu0 %v763
    %874 = vmatpush.bf16.msra.mxu0 %v762
    %875 = vmatpush.bf16.msra.mxu0 %v761
    %876 = vmatpush.bf16.msra.mxu0 %v760
    %877 = vmatpush.bf16.msra.mxu0 %v759
    %878 = vmatpush.bf16.msra.mxu0 %v758
    %879 = vmatpush.bf16.msra.mxu0 %v757
    %880 = vmatpush.bf16.msra.mxu0 %v756
    %881 = vmatmul.bf16.gmra.mxu0 %v189
    %v882 = vpop.f32.mrf.mxu0
    %v883 = vadd.f32 %v870, %v882
    %v884 = vpop.f32.mrf.mxu0
    %885 = vdwg.mxu0
    %886 = vmatpush.bf16.msra.mxu0 %v771
    %887 = vmatpush.bf16.msra.mxu0 %v770
    %888 = vmatpush.bf16.msra.mxu0 %v769
    %889 = vmatpush.bf16.msra.mxu0 %v768
    %890 = vmatpush.bf16.msra.mxu0 %v767
    %891 = vmatpush.bf16.msra.mxu0 %v766
    %892 = vmatpush.bf16.msra.mxu0 %v765
    %893 = vmatpush.bf16.msra.mxu0 %v764
    %894 = vmatmul.bf16.gmra.mxu0 %v190
    %v895 = vpop.f32.mrf.mxu0
    %v896 = vadd.f32 %v883, %v895
    %v897 = vpop.f32.mrf.mxu0
    %898 = vdwg.mxu0
    %899 = vmatpush.bf16.msra.mxu0 %v779
    %900 = vmatpush.bf16.msra.mxu0 %v778
    %901 = vmatpush.bf16.msra.mxu0 %v777
    %902 = vmatpush.bf16.msra.mxu0 %v776
    %903 = vmatpush.bf16.msra.mxu0 %v775
    %904 = vmatpush.bf16.msra.mxu0 %v774
    %905 = vmatpush.bf16.msra.mxu0 %v773
    %906 = vmatpush.bf16.msra.mxu0 %v772
    %907 = vmatmul.bf16.gmra.mxu0 %v191
    %v908 = vpop.f32.mrf.mxu0
    %v909 = vadd.f32 %v896, %v908
    %v910 = vpop.f32.mrf.mxu0
    %911 = vdwg.mxu0
    %912 = vmatpush.bf16.msra.mxu0 0
    %913 = vmatpush.bf16.msra.mxu0 0
    %914 = vmatpush.bf16.msra.mxu0 0
    %915 = vmatpush.bf16.msra.mxu0 0
    %916 = vmatpush.bf16.msra.mxu0 0
    %917 = vmatpush.bf16.msra.mxu0 0
    %918 = vmatpush.bf16.msra.mxu0 0
    %919 = vmatpush.bf16.msra.mxu0 %v780
    %920 = vmatmul.bf16.gmra.mxu0 %v832
    %v921 = vpop.f32.mrf.mxu0
    %v922 = vadd.f32 %v909, %v921
    %v923 = vpop.f32.mrf.mxu0
    %924 = vdwg.mxu0
    %v929 = vunpack.c.l.b16 %v132
    %v930 = vunpack.c.h.b16 %v132
    %v931 = vunpack.c.l.b16 %v133
    %v932 = vunpack.c.h.b16 %v133
    %v933 = vunpack.c.l.b16 %v134
    %v934 = vunpack.c.h.b16 %v134
    %v935 = vunpack.c.l.b16 %v135
    %v936 = vpack.c.b16 %v929, %v929
    %v937 = vpack.c.b16 %v930, %v930
    %v938 = vpack.c.b16 %v931, %v931
    %v939 = vpack.c.b16 %v932, %v932
    %v940 = vpack.c.b16 %v933, %v933
    %v941 = vpack.c.b16 %v934, %v934
    %v942 = vpack.c.b16 %v935, %v935
    %v950 = vsel %vm830, %v942, 0
    %952 = vmatpush.bf16.msra.mxu0 %v739
    %953 = vmatpush.bf16.msra.mxu0 %v738
    %954 = vmatpush.bf16.msra.mxu0 %v737
    %955 = vmatpush.bf16.msra.mxu0 %v736
    %956 = vmatpush.bf16.msra.mxu0 %v735
    %957 = vmatpush.bf16.msra.mxu0 %v734
    %958 = vmatpush.bf16.msra.mxu0 %v733
    %959 = vmatpush.bf16.msra.mxu0 %v732
    %960 = vmatmul.bf16.gmra.mxu0 %v936
    %v961 = vpop.f32.mrf.mxu0
    %v962 = vadd.f32 %v922, %v961
    %v963 = vpop.f32.mrf.mxu0
    %964 = vdwg.mxu0
    %965 = vmatpush.bf16.msra.mxu0 %v747
    %966 = vmatpush.bf16.msra.mxu0 %v746
    %967 = vmatpush.bf16.msra.mxu0 %v745
    %968 = vmatpush.bf16.msra.mxu0 %v744
    %969 = vmatpush.bf16.msra.mxu0 %v743
    %970 = vmatpush.bf16.msra.mxu0 %v742
    %971 = vmatpush.bf16.msra.mxu0 %v741
    %972 = vmatpush.bf16.msra.mxu0 %v740
    %973 = vmatmul.bf16.gmra.mxu0 %v937
    %v974 = vpop.f32.mrf.mxu0
    %v975 = vadd.f32 %v962, %v974
    %v976 = vpop.f32.mrf.mxu0
    %977 = vdwg.mxu0
    %978 = vmatpush.bf16.msra.mxu0 %v755
    %979 = vmatpush.bf16.msra.mxu0 %v754
    %980 = vmatpush.bf16.msra.mxu0 %v753
    %981 = vmatpush.bf16.msra.mxu0 %v752
    %982 = vmatpush.bf16.msra.mxu0 %v751
    %983 = vmatpush.bf16.msra.mxu0 %v750
    %984 = vmatpush.bf16.msra.mxu0 %v749
    %985 = vmatpush.bf16.msra.mxu0 %v748
    %986 = vmatmul.bf16.gmra.mxu0 %v938
    %v987 = vpop.f32.mrf.mxu0
    %v988 = vadd.f32 %v975, %v987
    %v989 = vpop.f32.mrf.mxu0
    %990 = vdwg.mxu0
    %991 = vmatpush.bf16.msra.mxu0 %v763
    %992 = vmatpush.bf16.msra.mxu0 %v762
    %993 = vmatpush.bf16.msra.mxu0 %v761
    %994 = vmatpush.bf16.msra.mxu0 %v760
    %995 = vmatpush.bf16.msra.mxu0 %v759
    %996 = vmatpush.bf16.msra.mxu0 %v758
    %997 = vmatpush.bf16.msra.mxu0 %v757
    %998 = vmatpush.bf16.msra.mxu0 %v756
    %999 = vmatmul.bf16.gmra.mxu0 %v939
    %v1000 = vpop.f32.mrf.mxu0
    %v1001 = vadd.f32 %v988, %v1000
    %v1002 = vpop.f32.mrf.mxu0
    %1003 = vdwg.mxu0
    %1004 = vmatpush.bf16.msra.mxu0 %v771
    %1005 = vmatpush.bf16.msra.mxu0 %v770
    %1006 = vmatpush.bf16.msra.mxu0 %v769
    %1007 = vmatpush.bf16.msra.mxu0 %v768
    %1008 = vmatpush.bf16.msra.mxu0 %v767
    %1009 = vmatpush.bf16.msra.mxu0 %v766
    %1010 = vmatpush.bf16.msra.mxu0 %v765
    %1011 = vmatpush.bf16.msra.mxu0 %v764
    %1012 = vmatmul.bf16.gmra.mxu0 %v940
    %v1013 = vpop.f32.mrf.mxu0
    %v1014 = vadd.f32 %v1001, %v1013
    %v1015 = vpop.f32.mrf.mxu0
    %1016 = vdwg.mxu0
    %1017 = vmatpush.bf16.msra.mxu0 %v779
    %1018 = vmatpush.bf16.msra.mxu0 %v778
    %1019 = vmatpush.bf16.msra.mxu0 %v777
    %1020 = vmatpush.bf16.msra.mxu0 %v776
    %1021 = vmatpush.bf16.msra.mxu0 %v775
    %1022 = vmatpush.bf16.msra.mxu0 %v774
    %1023 = vmatpush.bf16.msra.mxu0 %v773
    %1024 = vmatpush.bf16.msra.mxu0 %v772
    %1025 = vmatmul.bf16.gmra.mxu0 %v941
    %v1026 = vpop.f32.mrf.mxu0
    %v1027 = vadd.f32 %v1014, %v1026
    %v1028 = vpop.f32.mrf.mxu0
    %1029 = vdwg.mxu0
    %1030 = vmatpush.bf16.msra.mxu0 0
    %1031 = vmatpush.bf16.msra.mxu0 0
    %1032 = vmatpush.bf16.msra.mxu0 0
    %1033 = vmatpush.bf16.msra.mxu0 0
    %1034 = vmatpush.bf16.msra.mxu0 0
    %1035 = vmatpush.bf16.msra.mxu0 0
    %1036 = vmatpush.bf16.msra.mxu0 0
    %1037 = vmatpush.bf16.msra.mxu0 %v780
    %1038 = vmatmul.bf16.gmra.mxu0 %v950
    %v1039 = vpop.f32.mrf.mxu0
    %v1040 = vadd.f32 %v1027, %v1039
    %v1041 = vpop.f32.mrf.mxu0
    %1042 = vdwg.mxu0
    %1043 = vmatpush.bf16.msra.mxu0 %v494
    %1044 = vmatpush.bf16.msra.mxu0 %v493
    %1045 = vmatpush.bf16.msra.mxu0 %v492
    %1046 = vmatpush.bf16.msra.mxu0 %v491
    %1047 = vmatpush.bf16.msra.mxu0 %v490
    %1048 = vmatpush.bf16.msra.mxu0 %v489
    %1049 = vmatpush.bf16.msra.mxu0 %v488
    %1050 = vmatpush.bf16.msra.mxu0 %v487
    %1051 = vmatmul.bf16.gmra.mxu0 %v936
    %v1052 = vpop.f32.mrf.mxu0
    %v1053 = vadd.f32 0.0, %v1052
    %v1054 = vpop.f32.mrf.mxu0
    %1055 = vdwg.mxu0
    %1056 = vmatpush.bf16.msra.mxu0 %v502
    %1057 = vmatpush.bf16.msra.mxu0 %v501
    %1058 = vmatpush.bf16.msra.mxu0 %v500
    %1059 = vmatpush.bf16.msra.mxu0 %v499
    %1060 = vmatpush.bf16.msra.mxu0 %v498
    %1061 = vmatpush.bf16.msra.mxu0 %v497
    %1062 = vmatpush.bf16.msra.mxu0 %v496
    %1063 = vmatpush.bf16.msra.mxu0 %v495
    %1064 = vmatmul.bf16.gmra.mxu0 %v937
    %v1065 = vpop.f32.mrf.mxu0
    %v1066 = vadd.f32 %v1053, %v1065
    %v1067 = vpop.f32.mrf.mxu0
    %1068 = vdwg.mxu0
    %1069 = vmatpush.bf16.msra.mxu0 %v510
    %1070 = vmatpush.bf16.msra.mxu0 %v509
    %1071 = vmatpush.bf16.msra.mxu0 %v508
    %1072 = vmatpush.bf16.msra.mxu0 %v507
    %1073 = vmatpush.bf16.msra.mxu0 %v506
    %1074 = vmatpush.bf16.msra.mxu0 %v505
    %1075 = vmatpush.bf16.msra.mxu0 %v504
    %1076 = vmatpush.bf16.msra.mxu0 %v503
    %1077 = vmatmul.bf16.gmra.mxu0 %v938
    %v1078 = vpop.f32.mrf.mxu0
    %v1079 = vadd.f32 %v1066, %v1078
    %v1080 = vpop.f32.mrf.mxu0
    %1081 = vdwg.mxu0
    %1082 = vmatpush.bf16.msra.mxu0 %v518
    %1083 = vmatpush.bf16.msra.mxu0 %v517
    %1084 = vmatpush.bf16.msra.mxu0 %v516
    %1085 = vmatpush.bf16.msra.mxu0 %v515
    %1086 = vmatpush.bf16.msra.mxu0 %v514
    %1087 = vmatpush.bf16.msra.mxu0 %v513
    %1088 = vmatpush.bf16.msra.mxu0 %v512
    %1089 = vmatpush.bf16.msra.mxu0 %v511
    %1090 = vmatmul.bf16.gmra.mxu0 %v939
    %v1091 = vpop.f32.mrf.mxu0
    %v1092 = vadd.f32 %v1079, %v1091
    %v1093 = vpop.f32.mrf.mxu0
    %1094 = vdwg.mxu0
    %1095 = vmatpush.bf16.msra.mxu0 %v526
    %1096 = vmatpush.bf16.msra.mxu0 %v525
    %1097 = vmatpush.bf16.msra.mxu0 %v524
    %1098 = vmatpush.bf16.msra.mxu0 %v523
    %1099 = vmatpush.bf16.msra.mxu0 %v522
    %1100 = vmatpush.bf16.msra.mxu0 %v521
    %1101 = vmatpush.bf16.msra.mxu0 %v520
    %1102 = vmatpush.bf16.msra.mxu0 %v519
    %1103 = vmatmul.bf16.gmra.mxu0 %v940
    %v1104 = vpop.f32.mrf.mxu0
    %v1105 = vadd.f32 %v1092, %v1104
    %v1106 = vpop.f32.mrf.mxu0
    %1107 = vdwg.mxu0
    %1108 = vmatpush.bf16.msra.mxu0 %v534
    %1109 = vmatpush.bf16.msra.mxu0 %v533
    %1110 = vmatpush.bf16.msra.mxu0 %v532
    %1111 = vmatpush.bf16.msra.mxu0 %v531
    %1112 = vmatpush.bf16.msra.mxu0 %v530
    %1113 = vmatpush.bf16.msra.mxu0 %v529
    %1114 = vmatpush.bf16.msra.mxu0 %v528
    %1115 = vmatpush.bf16.msra.mxu0 %v527
    %1116 = vmatmul.bf16.gmra.mxu0 %v941
    %v1117 = vpop.f32.mrf.mxu0
    %v1118 = vadd.f32 %v1105, %v1117
    %v1119 = vpop.f32.mrf.mxu0
    %1120 = vdwg.mxu0
    %1121 = vmatpush.bf16.msra.mxu0 0
    %1122 = vmatpush.bf16.msra.mxu0 0
    %1123 = vmatpush.bf16.msra.mxu0 0
    %1124 = vmatpush.bf16.msra.mxu0 0
    %1125 = vmatpush.bf16.msra.mxu0 0
    %1126 = vmatpush.bf16.msra.mxu0 0
    %1127 = vmatpush.bf16.msra.mxu0 0
    %1128 = vmatpush.bf16.msra.mxu0 %v535
    %1129 = vmatmul.bf16.gmra.mxu0 %v950
    %v1130 = vpop.f32.mrf.mxu0
    %v1131 = vadd.f32 %v1118, %v1130
    %v1132 = vpop.f32.mrf.mxu0
    %1133 = vdwg.mxu0
    %v1134 = vadd.f32 %v1040, %v1131
    %v1135 = vlaneseq
    %v1136 = vand.u32 %v1135, 127
    %vm1137 = vcmp.lt.s32.totalorder %v1136, 10
    %v1138 = vsel %vm1137, %v1134, -inf
    %vm1139 = vcmask 123904
    %v1140 = vsel %vm1139, %v1138, -inf
    %1141 = vmax.xlane.f32.xlu0 %v1140
    %v1142 = vpop.xlane.xlu0 %1141
    %v1143 = vsub.f32 %v1134, %v1142
    %v1144 = vmul.f32 %v1143, 1.442695
    %v1145 = vpow.pop %v1144
    %v1146 = vsel %vm1137, %v1145, 0.0
    %v1147 = vsel %vm1139, %v1146, 0.0
    %1148 = vadd.xlane.f32.xlu0 %v1147
    %v1149 = vpop.xlane.xlu0 %1148
    %v1150 = vlog2.pop %v1149
    %v1151 = vmul.f32 %v1150, 0.6931472
    %v1152 = vsub.f32 %v1143, %v1151
    %1153 = vst.msk [vmem:[#allocation2] sm:$0x3] %vm1139, %v1152
    // Predicated region
    $region10: #{conv2dsigmoid_5_forward.1} parent=1 // pred_check
      _
    $region11: #{conv2dsigmoid_5_forward.1} parent=1 // pred_check_branch
      %1155 = sbr.rel (0) target = $region13
    $region12: #{conv2dsigmoid_5_forward.1} parent=1 // pred_region
      %1157 = vsyncadd [#allocation3], 0
      %s1159 = sshll.u32 [#allocation2], 4
      %s1160 = int_to_ptr.vmem [resolvable:$true] %s1159
      %s1161 = sshll.u32 %s2, 4
      %s1162 = int_to_ptr.hbm [resolvable:$true] %s1161
      %1164 = dma.vmem_to_hbm [thread:$0]  %s1160, 32, %s1162, [#allocation3]
    $region13: #{conv2dsigmoid_5_forward.1} parent=1 // pred_fallthru
      _
    // Predicated region
    $region14: #{conv2dsigmoid_5_forward.1} parent=1 // pred_check
      _
    $region15: #{conv2dsigmoid_5_forward.1} parent=1 // pred_check_branch
      %1166 = sbr.rel (0) target = $region17
    $region16: #{conv2dsigmoid_5_forward.1} parent=1 // pred_region
      %1168 = dma.done [#allocation3], 32
    $region17: #{conv2dsigmoid_5_forward.1} parent=1 // pred_fallthru
      _
    %1169 = vsyncpa [#allocation3], 1

</llo_original>
